<compile_context>
chip_gen: v6e
topology: v6e:2x2x1
jax: 0.10.0
libtpu: 0.0.40
codegen_flags: <defaults>
</compile_context>

<pallas_src>
import functools

import jax
import jax.numpy as jnp
from jax.experimental import pallas as pl
from jax.experimental.pallas import tpu as pltpu


LAYER_SIZE = 128


def _mlp_kernel(x_ref, w1t_ref, b1_ref, w2t_ref, b2_ref, w3_ref, b3_ref,
                o_ref, *, use_tanh, c_in, c_out, hidden_bf16, l3_vpu):
    # Blocks (channels-first): x (1, c_in, TN) ; o (1, c_out, TN).
    x = x_ref[0]                                            # (c_in, TN) f32

    # ---- layer 1: relu(bn1(conv1)) -- tiny K contraction on the VPU --------
    w1t = w1t_ref[...]                                      # (128, c_in) f32
    if c_in <= 8:
        acc = b1_ref[...] + w1t[:, 0:1] * x[0:1, :]         # (128, TN)
        for k in range(1, c_in):
            acc = acc + w1t[:, k:k + 1] * x[k:k + 1, :]
    else:
        acc = jnp.dot(w1t, x, preferred_element_type=jnp.float32) + b1_ref[...]
    h = jnp.maximum(acc, 0.0)                               # (128, TN) f32

    # ---- layer 2: relu(bn2(conv2)) -- 128x128 on the MXU --------------------
    # Weight arrives pre-cast (bf16 in the fast path); only the activation is
    # cast per grid step.  Accumulation stays f32.
    h_mm = h.astype(jnp.bfloat16) if hidden_bf16 else h
    h2 = jnp.dot(w2t_ref[...], h_mm, preferred_element_type=jnp.float32)
    h2 = jnp.maximum(h2 + b2_ref[...], 0.0)                 # (128, TN) f32

    # ---- layer 3: conv3 (+ tanh) --------------------------------------------
    if l3_vpu:
        # Strict-f32 path with tiny c_out: an f32 (c_out,128)x(128,TN) matmul
        # pads to a full MXU output tile (~doubles emulated-MXU busy time for
        # ~2% of the FLOPs).  Do it as VPU broadcast-multiplies + XLU
        # cross-sublane reductions instead (XLU slot is otherwise idle).
        w3 = w3_ref[...]                                    # (128, c_out) f32
        rows = []
        for c in range(c_out):
            prod = w3[:, c:c + 1] * h2                      # (128, TN)  VPU
            rows.append(jnp.sum(prod, axis=0, keepdims=True))  # (1, TN) XLU
        y = jnp.concatenate(rows, axis=0) + b3_ref[...]     # (c_out, TN)
    else:
        # bf16 fast path: VALU is the binding slot post-bf16, MXU has slack,
        # so keep layer 3 on the MXU (and don't add VPU work).
        h2_mm = h2.astype(jnp.bfloat16) if hidden_bf16 else h2
        y = jnp.dot(w3_ref[...], h2_mm, preferred_element_type=jnp.float32)
        y = y + b3_ref[...]                                 # (c_out, TN)
    if use_tanh:
        y = jnp.tanh(y)                                     # EUP
    o_ref[0] = y.astype(o_ref.dtype)


def patch_deformation_mlp(x, params, *, tanh=True, tile_n=2048,
                          hidden_bf16=True, min_grid_points=4,
                          vmem_limit_bytes=32 * 1024 * 1024):
    """x: (B, patchDim, N) float32, NCW like the PyTorch module.

    hidden_bf16=True (default): bf16 MXU matmuls with f32 accumulation (fast
    path, ~1e-3 relative error).  hidden_bf16=False: strict f32 everywhere.
    """
    (w1, b1, g1, be1, m1, v1,
     w2, b2, g2, be2, m2, v2,
     w3, b3) = params
    eps = 1e-5

    # Fold eval-mode BatchNorm into the preceding 1x1 conv (plain-JAX glue):
    #   bn(z) = g * (z - m) / sqrt(v + eps) + beta
    s1 = g1 / jnp.sqrt(v1 + eps)                  # (128,)
    w1_eff = w1 * s1[None, :]                     # (patchDim, 128)
    b1_eff = (b1 - m1) * s1 + be1                 # (128,)
    s2 = g2 / jnp.sqrt(v2 + eps)
    w2_eff = w2 * s2[None, :]                     # (128, 128)
    b2_eff = (b2 - m2) * s2 + be2                 # (128,)

    B, c_in, N = x.shape
    c_out = w3.shape[1]
    l3_vpu = (not hidden_bf16) and (c_out <= 8)

    # Channels-first weights so every layer is  out = W^T @ act.
    mm_dtype = jnp.bfloat16 if hidden_bf16 else jnp.float32
    w1t = jnp.transpose(w1_eff)                         # (128, c_in) f32, tiny K
    w2t = jnp.transpose(w2_eff).astype(mm_dtype)        # (128, 128)  cast hoisted
    if l3_vpu:
        w3_arg = w3.astype(jnp.float32)                 # (128, c_out)  VPU path
        w3_spec_shape = (LAYER_SIZE, c_out)
    else:
        w3_arg = jnp.transpose(w3).astype(mm_dtype)     # (c_out, 128)  MXU path
        w3_spec_shape = (c_out, LAYER_SIZE)

    # Lane-dense tile selection.  No explicit pad/slice: Pallas masks the
    # ragged tail block, and the math is column-wise independent so garbage in
    # the out-of-bounds tail columns never touches valid outputs.
    n_lane = pl.cdiv(N, 128) * 128
    tile = max(128, (min(tile_n, n_lane) // 128) * 128)
    # Keep enough grid points to occupy both v7x TensorCores (both grid axes
    # are "parallel"): shrink the tile until B * n_tiles >= min_grid_points.
    while tile > 128 and B * pl.cdiv(N, tile) < min_grid_points:
        tile = max(128, ((tile // 2) // 128) * 128)
    grid = (B, pl.cdiv(N, tile))

    kernel = functools.partial(_mlp_kernel, use_tanh=tanh, c_in=c_in,
                               c_out=c_out, hidden_bf16=hidden_bf16,
                               l3_vpu=l3_vpu)

    flops = 2 * LAYER_SIZE * (c_in + LAYER_SIZE + c_out) * B * N
    bytes_accessed = (4 * B * N * (c_in + c_out)
                      + 4 * LAYER_SIZE * (c_in + LAYER_SIZE + c_out + 3))
    cost = pl.CostEstimate(flops=flops,
                           transcendentals=(c_out * B * N if tanh else 0),
                           bytes_accessed=bytes_accessed)

    out = pl.pallas_call(
        kernel,
        out_shape=jax.ShapeDtypeStruct((B, c_out, N), jnp.float32),
        grid_spec=pltpu.PrefetchScalarGridSpec(
            num_scalar_prefetch=0,
            grid=grid,
            in_specs=[
                pl.BlockSpec((1, c_in, tile), lambda b, n: (b, 0, n)),
                pl.BlockSpec((LAYER_SIZE, c_in), lambda b, n: (0, 0)),
                pl.BlockSpec((LAYER_SIZE, 1), lambda b, n: (0, 0)),
                pl.BlockSpec((LAYER_SIZE, LAYER_SIZE), lambda b, n: (0, 0)),
                pl.BlockSpec((LAYER_SIZE, 1), lambda b, n: (0, 0)),
                pl.BlockSpec(w3_spec_shape, lambda b, n: (0, 0)),
                pl.BlockSpec((c_out, 1), lambda b, n: (0, 0)),
            ],
            out_specs=pl.BlockSpec((1, c_out, tile), lambda b, n: (b, 0, n)),
        ),
        compiler_params=pltpu.CompilerParams(
            dimension_semantics=("parallel", "parallel"),
            vmem_limit_bytes=vmem_limit_bytes),
        cost_estimate=cost,
    )(x,
      w1t, b1_eff.reshape(-1, 1),
      w2t, b2_eff.reshape(-1, 1),
      w3_arg, b3.reshape(-1, 1))

    return out                                     # (B, patchDeformDim, N)


def init_params(key, patch_dim=2, patch_deform_dim=3):
    ks = jax.random.split(key, 14)
    scale = 0.1
    w1 = scale * jax.random.normal(ks[0], (patch_dim, LAYER_SIZE), jnp.float32)
    b1 = scale * jax.random.normal(ks[1], (LAYER_SIZE,), jnp.float32)
    g1 = 1.0 + scale * jax.random.normal(ks[2], (LAYER_SIZE,), jnp.float32)
    be1 = scale * jax.random.normal(ks[3], (LAYER_SIZE,), jnp.float32)
    m1 = scale * jax.random.normal(ks[4], (LAYER_SIZE,), jnp.float32)
    v1 = 1.0 + jnp.abs(scale * jax.random.normal(ks[5], (LAYER_SIZE,), jnp.float32))
    w2 = scale * jax.random.normal(ks[6], (LAYER_SIZE, LAYER_SIZE), jnp.float32)
    b2 = scale * jax.random.normal(ks[7], (LAYER_SIZE,), jnp.float32)
    g2 = 1.0 + scale * jax.random.normal(ks[8], (LAYER_SIZE,), jnp.float32)
    be2 = scale * jax.random.normal(ks[9], (LAYER_SIZE,), jnp.float32)
    m2 = scale * jax.random.normal(ks[10], (LAYER_SIZE,), jnp.float32)
    v2 = 1.0 + jnp.abs(scale * jax.random.normal(ks[11], (LAYER_SIZE,), jnp.float32))
    w3 = scale * jax.random.normal(ks[12], (LAYER_SIZE, patch_deform_dim), jnp.float32)
    b3 = scale * jax.random.normal(ks[13], (patch_deform_dim,), jnp.float32)
    return (w1, b1, g1, be1, m1, v1, w2, b2, g2, be2, m2, v2, w3, b3)


def reference_forward(x, params, tanh=True):
    """Pure-JAX reference mirroring the PyTorch forward (eval-mode BN)."""
    (w1, b1, g1, be1, m1, v1,
     w2, b2, g2, be2, m2, v2,
     w3, b3) = params
    eps = 1e-5
    xt = jnp.transpose(x, (0, 2, 1))                      # (B, N, Cin)
    h = xt @ w1 + b1
    h = g1 * (h - m1) / jnp.sqrt(v1 + eps) + be1
    h = jnp.maximum(h, 0.0)
    h = h @ w2 + b2
    h = g2 * (h - m2) / jnp.sqrt(v2 + eps) + be2
    h = jnp.maximum(h, 0.0)
    y = h @ w3 + b3
    if tanh:
        y = jnp.tanh(y)
    return jnp.transpose(y, (0, 2, 1))                    # (B, Cout, N)


if __name__ == "__main__":
    key = jax.random.PRNGKey(0)
    pkey, xkey = jax.random.split(key)

    patch_dim, patch_deform_dim = 2, 3
    B, N = 2, 250                      # small shapes; N deliberately not a multiple of 128

    params = init_params(pkey, patch_dim, patch_deform_dim)
    x = jax.random.normal(xkey, (B, patch_dim, N), jnp.float32)   # NCW input

    ref = reference_forward(x, params, tanh=True)

    # Strict-f32 mode (validation): must track the f32 reference closely.
    out_f32 = jax.block_until_ready(
        patch_deformation_mlp(x, params, tanh=True, hidden_bf16=False))
    assert out_f32.shape == (B, patch_deform_dim, N)
    assert jnp.allclose(out_f32, ref, atol=2e-5, rtol=2e-5), "f32 mode mismatch"

    # Default bf16 fast path: bf16 MXU matmuls with f32 accumulation.
    out_fast = jax.block_until_ready(patch_deformation_mlp(x, params, tanh=True))
    assert out_fast.shape == (B, patch_deform_dim, N)
    assert jnp.allclose(out_fast, ref, atol=2e-2, rtol=2e-2), "bf16 mode mismatch"

    print("KERNEL_OK")
</pallas_src>

<mosaic_0001>
module attributes {stable_mosaic.version = 11 : i64} {
  func.func @_mlp_kernel(%arg0: i32, %arg1: i32, %arg2: memref<1x2x128xf32, #tpu.memory_space<vmem>>, %arg3: memref<128x2xf32, #tpu.memory_space<vmem>>, %arg4: memref<128x1xf32, #tpu.memory_space<vmem>>, %arg5: memref<128x128xf32, #tpu.memory_space<vmem>>, %arg6: memref<128x1xf32, #tpu.memory_space<vmem>>, %arg7: memref<128x3xf32, #tpu.memory_space<vmem>>, %arg8: memref<3x1xf32, #tpu.memory_space<vmem>>, %arg9: memref<1x3x128xf32, #tpu.memory_space<vmem>>) attributes {dimension_semantics = [#tpu.dimension_semantics<parallel>, #tpu.dimension_semantics<parallel>], iteration_bounds = array<i64: 2, 2>, scalar_prefetch = 0 : i64, scratch_operands = 0 : i64, tpu.core_type = #tpu.core_type<tc>, window_params = [{transform_indices = @transform_0, window_bounds = array<i64: 1, 2, 128>}, {pipeline_mode = #tpu.pipeline_mode<synchronous>, transform_indices = @transform_1, window_bounds = array<i64: 128, 2>}, {pipeline_mode = #tpu.pipeline_mode<synchronous>, transform_indices = @transform_2, window_bounds = array<i64: 128, 1>}, {pipeline_mode = #tpu.pipeline_mode<synchronous>, transform_indices = @transform_3, window_bounds = array<i64: 128, 128>}, {pipeline_mode = #tpu.pipeline_mode<synchronous>, transform_indices = @transform_4, window_bounds = array<i64: 128, 1>}, {pipeline_mode = #tpu.pipeline_mode<synchronous>, transform_indices = @transform_5, window_bounds = array<i64: 128, 3>}, {pipeline_mode = #tpu.pipeline_mode<synchronous>, transform_indices = @transform_6, window_bounds = array<i64: 3, 1>}, {transform_indices = @transform_7, window_bounds = array<i64: 1, 3, 128>}]} {
    %c0 = arith.constant 0 : index
    %c0_0 = arith.constant 0 : index
    %c0_1 = arith.constant 0 : index
    %0 = vector.load %arg2[%c0, %c0_0, %c0_1] : memref<1x2x128xf32, #tpu.memory_space<vmem>>, vector<1x2x128xf32>
    %1 = vector.shape_cast %0 : vector<1x2x128xf32> to vector<2x128xf32>
    %c0_2 = arith.constant 0 : index
    %c0_3 = arith.constant 0 : index
    %2 = vector.load %arg3[%c0_2, %c0_3] : memref<128x2xf32, #tpu.memory_space<vmem>>, vector<128x2xf32>
    %c0_4 = arith.constant 0 : index
    %c0_5 = arith.constant 0 : index
    %3 = vector.load %arg4[%c0_4, %c0_5] : memref<128x1xf32, #tpu.memory_space<vmem>>, vector<128x1xf32>
    %4 = vector.extract_strided_slice %2 {offsets = [0, 0], sizes = [128, 1], strides = [1, 1]} : vector<128x2xf32> to vector<128x1xf32>
    %5 = vector.extract_strided_slice %1 {offsets = [0, 0], sizes = [1, 128], strides = [1, 1]} : vector<2x128xf32> to vector<1x128xf32>
    %6 = vector.broadcast %4 : vector<128x1xf32> to vector<128x128xf32>
    %7 = vector.broadcast %5 : vector<1x128xf32> to vector<128x128xf32>
    %8 = arith.mulf %6, %7 : vector<128x128xf32>
    %9 = vector.broadcast %3 : vector<128x1xf32> to vector<128x128xf32>
    %10 = arith.addf %9, %8 : vector<128x128xf32>
    %11 = vector.extract_strided_slice %2 {offsets = [0, 1], sizes = [128, 1], strides = [1, 1]} : vector<128x2xf32> to vector<128x1xf32>
    %12 = vector.extract_strided_slice %1 {offsets = [1, 0], sizes = [1, 128], strides = [1, 1]} : vector<2x128xf32> to vector<1x128xf32>
    %13 = vector.broadcast %11 : vector<128x1xf32> to vector<128x128xf32>
    %14 = vector.broadcast %12 : vector<1x128xf32> to vector<128x128xf32>
    %15 = arith.mulf %13, %14 : vector<128x128xf32>
    %16 = arith.addf %10, %15 : vector<128x128xf32>
    %cst = arith.constant 0.000000e+00 : f32
    %17 = vector.broadcast %cst : f32 to vector<128x128xf32>
    %18 = arith.maximumf %16, %17 : vector<128x128xf32>
    %c0_6 = arith.constant 0 : index
    %c0_7 = arith.constant 0 : index
    %19 = vector.load %arg5[%c0_6, %c0_7] : memref<128x128xf32, #tpu.memory_space<vmem>>, vector<128x128xf32>
    %cst_8 = arith.constant dense<0.000000e+00> : vector<128x128xf32>
    %20 = tpu.matmul %19, %18, %cst_8 {dimension_numbers = #tpu.dot_dimension_numbers<[1], [0], [0], [1], [0, 0, 1, 1], [], []>} : vector<128x128xf32>, vector<128x128xf32>, vector<128x128xf32> -> vector<128x128xf32>
    %c0_9 = arith.constant 0 : index
    %c0_10 = arith.constant 0 : index
    %21 = vector.load %arg6[%c0_9, %c0_10] : memref<128x1xf32, #tpu.memory_space<vmem>>, vector<128x1xf32>
    %22 = vector.broadcast %21 : vector<128x1xf32> to vector<128x128xf32>
    %23 = arith.addf %20, %22 : vector<128x128xf32>
    %cst_11 = arith.constant 0.000000e+00 : f32
    %24 = vector.broadcast %cst_11 : f32 to vector<128x128xf32>
    %25 = arith.maximumf %23, %24 : vector<128x128xf32>
    %c0_12 = arith.constant 0 : index
    %c0_13 = arith.constant 0 : index
    %26 = vector.load %arg7[%c0_12, %c0_13] : memref<128x3xf32, #tpu.memory_space<vmem>>, vector<128x3xf32>
    %27 = vector.extract_strided_slice %26 {offsets = [0, 0], sizes = [128, 1], strides = [1, 1]} : vector<128x3xf32> to vector<128x1xf32>
    %28 = vector.broadcast %27 : vector<128x1xf32> to vector<128x128xf32>
    %29 = arith.mulf %28, %25 : vector<128x128xf32>
    %cst_14 = arith.constant dense<0.000000e+00> : vector<128xf32>
    %30 = vector.multi_reduction <add>, %29, %cst_14 [0] : vector<128x128xf32> to vector<128xf32>
    %31 = vector.shape_cast %30 : vector<128xf32> to vector<1x128xf32>
    %32 = vector.extract_strided_slice %26 {offsets = [0, 1], sizes = [128, 1], strides = [1, 1]} : vector<128x3xf32> to vector<128x1xf32>
    %33 = vector.broadcast %32 : vector<128x1xf32> to vector<128x128xf32>
    %34 = arith.mulf %33, %25 : vector<128x128xf32>
    %cst_15 = arith.constant dense<0.000000e+00> : vector<128xf32>
    %35 = vector.multi_reduction <add>, %34, %cst_15 [0] : vector<128x128xf32> to vector<128xf32>
    %36 = vector.shape_cast %35 : vector<128xf32> to vector<1x128xf32>
    %37 = vector.extract_strided_slice %26 {offsets = [0, 2], sizes = [128, 1], strides = [1, 1]} : vector<128x3xf32> to vector<128x1xf32>
    %38 = vector.broadcast %37 : vector<128x1xf32> to vector<128x128xf32>
    %39 = arith.mulf %38, %25 : vector<128x128xf32>
    %cst_16 = arith.constant dense<0.000000e+00> : vector<128xf32>
    %40 = vector.multi_reduction <add>, %39, %cst_16 [0] : vector<128x128xf32> to vector<128xf32>
    %41 = vector.shape_cast %40 : vector<128xf32> to vector<1x128xf32>
    %42 = tpu.concatenate %31, %36, %41 in 0 : vector<1x128xf32>, vector<1x128xf32>, vector<1x128xf32> -> vector<3x128xf32>
    %c0_17 = arith.constant 0 : index
    %c0_18 = arith.constant 0 : index
    %43 = vector.load %arg8[%c0_17, %c0_18] : memref<3x1xf32, #tpu.memory_space<vmem>>, vector<3x1xf32>
    %44 = vector.broadcast %43 : vector<3x1xf32> to vector<3x128xf32>
    %45 = arith.addf %42, %44 : vector<3x128xf32>
    %46 = math.tanh %45 : vector<3x128xf32>
    %c0_19 = arith.constant 0 : index
    %c0_20 = arith.constant 0 : index
    %c0_21 = arith.constant 0 : index
    %47 = vector.load %arg9[%c0_19, %c0_20, %c0_21] : memref<1x3x128xf32, #tpu.memory_space<vmem>>, vector<1x3x128xf32>
    %48 = vector.shape_cast %47 : vector<1x3x128xf32> to vector<3x128xf32>
    %49 = vector.shape_cast %46 : vector<3x128xf32> to vector<1x3x128xf32>
    tpu.vector_store %arg9[%c0_19, %c0_20, %c0_21], %49 {strides = array<i32>} : memref<1x3x128xf32, #tpu.memory_space<vmem>>, vector<1x3x128xf32>,
    return
  }
  func.func @transform_0(%arg0: i32, %arg1: i32) -> (i32, i32, i32) {
    %c0_i32 = arith.constant 0 : i32
    %c0_i32_0 = arith.constant 0 : i32
    return %arg0, %c0_i32, %arg1 : i32, i32, i32
  }
  func.func @transform_1(%arg0: i32, %arg1: i32) -> (i32, i32) {
    %c0_i32 = arith.constant 0 : i32
    %c0_i32_0 = arith.constant 0 : i32
    %c0_i32_1 = arith.constant 0 : i32
    return %c0_i32, %c0_i32_0 : i32, i32
  }
  func.func @transform_2(%arg0: i32, %arg1: i32) -> (i32, i32) {
    %c0_i32 = arith.constant 0 : i32
    %c0_i32_0 = arith.constant 0 : i32
    %c0_i32_1 = arith.constant 0 : i32
    return %c0_i32, %c0_i32_0 : i32, i32
  }
  func.func @transform_3(%arg0: i32, %arg1: i32) -> (i32, i32) {
    %c0_i32 = arith.constant 0 : i32
    %c0_i32_0 = arith.constant 0 : i32
    %c0_i32_1 = arith.constant 0 : i32
    return %c0_i32, %c0_i32_0 : i32, i32
  }
  func.func @transform_4(%arg0: i32, %arg1: i32) -> (i32, i32) {
    %c0_i32 = arith.constant 0 : i32
    %c0_i32_0 = arith.constant 0 : i32
    %c0_i32_1 = arith.constant 0 : i32
    return %c0_i32, %c0_i32_0 : i32, i32
  }
  func.func @transform_5(%arg0: i32, %arg1: i32) -> (i32, i32) {
    %c0_i32 = arith.constant 0 : i32
    %c0_i32_0 = arith.constant 0 : i32
    %c0_i32_1 = arith.constant 0 : i32
    return %c0_i32, %c0_i32_0 : i32, i32
  }
  func.func @transform_6(%arg0: i32, %arg1: i32) -> (i32, i32) {
    %c0_i32 = arith.constant 0 : i32
    %c0_i32_0 = arith.constant 0 : i32
    %c0_i32_1 = arith.constant 0 : i32
    return %c0_i32, %c0_i32_0 : i32, i32
  }
  func.func @transform_7(%arg0: i32, %arg1: i32) -> (i32, i32, i32) {
    %c0_i32 = arith.constant 0 : i32
    %c0_i32_0 = arith.constant 0 : i32
    return %arg0, %c0_i32, %arg1 : i32, i32, i32
  }
}

</mosaic_0001>

<llo_original>
// kernel: tpu_custom_call.1
$region0: #{tpu_custom_call.1}
  #allocation0 [shape = 'u32[]', space=smem, size = 0x4, offset = 0x4, fixed_abs, tag = 'smem constant byte address 0x4 - core index']
  #allocation1 [shape = 'u32[144,128]{1,0:T(1,128)}', space=vmem, size = 0x12000, scoped, tag = 'internal scratch']
  %s0 = inlined_call_operand.vmem [shape: f32[2,2,250], index: 0, kind: input, shape index: {}]
  %s1 = inlined_call_operand.vmem [shape: f32[128,2], index: 1, kind: input, shape index: {}]
  %s2 = inlined_call_operand.vmem [shape: f32[128,1], index: 2, kind: input, shape index: {}]
  %s3 = inlined_call_operand.vmem [shape: f32[128,128], index: 3, kind: input, shape index: {}]
  %s4 = inlined_call_operand.vmem [shape: f32[128,1], index: 4, kind: input, shape index: {}]
  %s5 = inlined_call_operand.vmem [shape: f32[128,3], index: 5, kind: input, shape index: {}]
  %s6 = inlined_call_operand.vmem [shape: f32[3,1], index: 6, kind: input, shape index: {}]
  %s7 = inlined_call_operand.vmem [shape: f32[2,3,250], index: 7, kind: output, shape index: {}]
  %s8 = sld [smem:[#allocation0]]
  $region61: #{tpu_custom_call.1} parent=0
    _
  %s10 = ssub.s32 1, %s8
  %s11 = scalar_select 0, %s10, %s8
  loop: start=0, step=1, limit=6
  $region2: #{tpu_custom_call.1} parent=0 // loop_pre_header
    _
  $region3: #{tpu_custom_call.1} parent=0 // loop_header
    %s13 = sphi 0, %s17
    %p14 = scmp.ge.s32.totalorder %s13, 6
    %s20 = sphi 0, %s32
    %s21 = sphi 0, %s28
    %s22 = sphi 0, %s20
    %s23 = sphi 0, %s21
    %s24 = sphi 0, %s22
    %s25 = sphi 0, %s23
    %s37 = sphi 0, %s39
    %s40 = sphi 0, %s37
    %s41 = sphi 0, %s40
    %s57 = sphi 0, %s41
    %s61 = sphi 0, %s61
    %s63 = sphi 0, %s61
    %s64 = sphi 0, %s63
    %s78 = sphi 0, %s64
    %s82 = sphi 0, %s82
    %s84 = sphi 0, %s82
    %s85 = sphi 0, %s84
    %s99 = sphi 0, %s85
    %s103 = sphi 0, %s103
    %s105 = sphi 0, %s103
    %s106 = sphi 0, %s105
    %s120 = sphi 0, %s106
    %s124 = sphi 0, %s124
    %s126 = sphi 0, %s124
    %s127 = sphi 0, %s126
    %s141 = sphi 0, %s127
    %s145 = sphi 0, %s145
    %s147 = sphi 0, %s145
    %s148 = sphi 0, %s147
    %s162 = sphi 0, %s148
    %s166 = sphi 0, %s166
    %s168 = sphi 0, %s166
    %s169 = sphi 0, %s168
    %s183 = sphi 0, %s169
    %s191 = sphi 0, %s193
    %s194 = sphi 0, %s191
    %s195 = sphi 0, %s194
    %s211 = sphi 0, %s195
  $region4: #{tpu_custom_call.1} parent=0 // loop_header_branch
    %16 = sbr.rel (%p14) target = $region8
  $region5: #{tpu_custom_call.1} parent=0 // loop_body
    %s18 = ssub.s32 %s13, 1
    %s19 = ssub.s32 %s13, 2
    %s26 = sadd.s32 1, %s21
    %p27 = scmp.ge.s32.totalorder %s26, 2
    %s28 = scalar_select %p27, 0, %s26
    %s29 = sadd.s32 1, %s20
    %s30 = scalar_select %p27, %s29, %s20
    %p31 = scmp.ge.s32.totalorder %s30, 2
    %s32 = scalar_select %p31, 0, %s30
    %s33 = ssub.s32 %s20, %s32
    %s34 = ssub.s32 %s21, %s28
    %s35 = sor.u32 %s33, %s34
    %p36 = scmp.eq.s32.totalorder %s35, 0
    %s38 = sadd.s32 %s37, 1
    %s39 = scalar_select %p36, %s37, %s38
    %p42 = pneg %p36
    %p43 = scmp.eq.s32.totalorder %s13, 3
    %p44 = por %p42, %p43
    %p45 = scmp.ne.s32.totalorder %s37, %s40
    %p46 = scmp.eq.s32.totalorder %s13, 0
    %p47 = por %p45, %p46
    %p48 = scmp.ne.s32.totalorder %s37, %s40
    %p49 = scmp.eq.s32.totalorder %s18, 3
    %p50 = por %p48, %p49
    %p51 = scmp.ne.s32.totalorder %s40, %s41
    %p52 = scmp.eq.s32.totalorder %s18, 0
    %p53 = por %p51, %p52
    %p54 = scmp.ne.s32.totalorder %s40, %s41
    %p55 = scmp.eq.s32.totalorder %s19, 3
    %p56 = por %p54, %p55
    %p58 = scmp.ne.s32.totalorder %s41, %s57
    %p59 = scmp.eq.s32.totalorder %s19, 0
    %p60 = por %p58, %p59
    %s62 = sadd.s32 %s61, 1
    %p65 = scmp.eq.s32.totalorder %s13, 3
    %p66 = scmp.ne.s32.totalorder %s61, %s63
    %p67 = scmp.eq.s32.totalorder %s13, 0
    %p68 = por %p66, %p67
    %p69 = scmp.ne.s32.totalorder %s61, %s63
    %p70 = scmp.eq.s32.totalorder %s18, 3
    %p71 = por %p69, %p70
    %p72 = scmp.ne.s32.totalorder %s63, %s64
    %p73 = scmp.eq.s32.totalorder %s18, 0
    %p74 = por %p72, %p73
    %p75 = scmp.ne.s32.totalorder %s63, %s64
    %p76 = scmp.eq.s32.totalorder %s19, 3
    %p77 = por %p75, %p76
    %p79 = scmp.ne.s32.totalorder %s64, %s78
    %p80 = scmp.eq.s32.totalorder %s19, 0
    %p81 = por %p79, %p80
    %s83 = sadd.s32 %s82, 1
    %p86 = scmp.eq.s32.totalorder %s13, 3
    %p87 = scmp.ne.s32.totalorder %s82, %s84
    %p88 = scmp.eq.s32.totalorder %s13, 0
    %p89 = por %p87, %p88
    %p90 = scmp.ne.s32.totalorder %s82, %s84
    %p91 = scmp.eq.s32.totalorder %s18, 3
    %p92 = por %p90, %p91
    %p93 = scmp.ne.s32.totalorder %s84, %s85
    %p94 = scmp.eq.s32.totalorder %s18, 0
    %p95 = por %p93, %p94
    %p96 = scmp.ne.s32.totalorder %s84, %s85
    %p97 = scmp.eq.s32.totalorder %s19, 3
    %p98 = por %p96, %p97
    %p100 = scmp.ne.s32.totalorder %s85, %s99
    %p101 = scmp.eq.s32.totalorder %s19, 0
    %p102 = por %p100, %p101
    %s104 = sadd.s32 %s103, 1
    %p107 = scmp.eq.s32.totalorder %s13, 3
    %p108 = scmp.ne.s32.totalorder %s103, %s105
    %p109 = scmp.eq.s32.totalorder %s13, 0
    %p110 = por %p108, %p109
    %p111 = scmp.ne.s32.totalorder %s103, %s105
    %p112 = scmp.eq.s32.totalorder %s18, 3
    %p113 = por %p111, %p112
    %p114 = scmp.ne.s32.totalorder %s105, %s106
    %p115 = scmp.eq.s32.totalorder %s18, 0
    %p116 = por %p114, %p115
    %p117 = scmp.ne.s32.totalorder %s105, %s106
    %p118 = scmp.eq.s32.totalorder %s19, 3
    %p119 = por %p117, %p118
    %p121 = scmp.ne.s32.totalorder %s106, %s120
    %p122 = scmp.eq.s32.totalorder %s19, 0
    %p123 = por %p121, %p122
    %s125 = sadd.s32 %s124, 1
    %p128 = scmp.eq.s32.totalorder %s13, 3
    %p129 = scmp.ne.s32.totalorder %s124, %s126
    %p130 = scmp.eq.s32.totalorder %s13, 0
    %p131 = por %p129, %p130
    %p132 = scmp.ne.s32.totalorder %s124, %s126
    %p133 = scmp.eq.s32.totalorder %s18, 3
    %p134 = por %p132, %p133
    %p135 = scmp.ne.s32.totalorder %s126, %s127
    %p136 = scmp.eq.s32.totalorder %s18, 0
    %p137 = por %p135, %p136
    %p138 = scmp.ne.s32.totalorder %s126, %s127
    %p139 = scmp.eq.s32.totalorder %s19, 3
    %p140 = por %p138, %p139
    %p142 = scmp.ne.s32.totalorder %s127, %s141
    %p143 = scmp.eq.s32.totalorder %s19, 0
    %p144 = por %p142, %p143
    %s146 = sadd.s32 %s145, 1
    %p149 = scmp.eq.s32.totalorder %s13, 3
    %p150 = scmp.ne.s32.totalorder %s145, %s147
    %p151 = scmp.eq.s32.totalorder %s13, 0
    %p152 = por %p150, %p151
    %p153 = scmp.ne.s32.totalorder %s145, %s147
    %p154 = scmp.eq.s32.totalorder %s18, 3
    %p155 = por %p153, %p154
    %p156 = scmp.ne.s32.totalorder %s147, %s148
    %p157 = scmp.eq.s32.totalorder %s18, 0
    %p158 = por %p156, %p157
    %p159 = scmp.ne.s32.totalorder %s147, %s148
    %p160 = scmp.eq.s32.totalorder %s19, 3
    %p161 = por %p159, %p160
    %p163 = scmp.ne.s32.totalorder %s148, %s162
    %p164 = scmp.eq.s32.totalorder %s19, 0
    %p165 = por %p163, %p164
    %s167 = sadd.s32 %s166, 1
    %p170 = scmp.eq.s32.totalorder %s13, 3
    %p171 = scmp.ne.s32.totalorder %s166, %s168
    %p172 = scmp.eq.s32.totalorder %s13, 0
    %p173 = por %p171, %p172
    %p174 = scmp.ne.s32.totalorder %s166, %s168
    %p175 = scmp.eq.s32.totalorder %s18, 3
    %p176 = por %p174, %p175
    %p177 = scmp.ne.s32.totalorder %s168, %s169
    %p178 = scmp.eq.s32.totalorder %s18, 0
    %p179 = por %p177, %p178
    %p180 = scmp.ne.s32.totalorder %s168, %s169
    %p181 = scmp.eq.s32.totalorder %s19, 3
    %p182 = por %p180, %p181
    %p184 = scmp.ne.s32.totalorder %s169, %s183
    %p185 = scmp.eq.s32.totalorder %s19, 0
    %p186 = por %p184, %p185
    %s187 = ssub.s32 %s20, %s32
    %s188 = ssub.s32 %s21, %s28
    %s189 = sor.u32 %s187, %s188
    %p190 = scmp.eq.s32.totalorder %s189, 0
    %s192 = sadd.s32 %s191, 1
    %s193 = scalar_select %p190, %s191, %s192
    %p196 = pneg %p190
    %p197 = scmp.eq.s32.totalorder %s13, 3
    %p198 = por %p196, %p197
    %p199 = scmp.ne.s32.totalorder %s191, %s194
    %p200 = scmp.eq.s32.totalorder %s13, 0
    %p201 = por %p199, %p200
    %p202 = scmp.ne.s32.totalorder %s191, %s194
    %p203 = scmp.eq.s32.totalorder %s18, 3
    %p204 = por %p202, %p203
    %p205 = scmp.ne.s32.totalorder %s194, %s195
    %p206 = scmp.eq.s32.totalorder %s18, 0
    %p207 = por %p205, %p206
    %p208 = scmp.ne.s32.totalorder %s194, %s195
    %p209 = scmp.eq.s32.totalorder %s19, 3
    %p210 = por %p208, %p209
    %p212 = scmp.ne.s32.totalorder %s195, %s211
    %p213 = scmp.eq.s32.totalorder %s19, 0
    %p214 = por %p212, %p213
    %p215 = scmp.le.s32.totalorder 1, %s13
    %p216 = scmp.lt.s32.totalorder %s13, 5
    %p217 = pnand %p215, %p216
    %p218 = pneg %p217
    // Predicated region
    $region9: #{tpu_custom_call.1} parent=5 // pred_check
      _
    $region10: #{tpu_custom_call.1} parent=5 // pred_check_branch
      %220 = sbr.rel (%p217) target = $region12
    $region11: #{tpu_custom_call.1} parent=5 // pred_region
      %s221 = ssub.s32 %s13, 1
      // Predicated region
      $region13: #{tpu_custom_call.1} parent=11 // pred_check
        %p222 = pneg %p74
      $region14: #{tpu_custom_call.1} parent=11 // pred_check_branch
        %224 = sbr.rel (%p222) target = $region16
      $region15: #{tpu_custom_call.1} parent=11 // pred_region
        _
      $region16: #{tpu_custom_call.1} parent=11 // pred_fallthru
        _
      // Predicated region
      $region17: #{tpu_custom_call.1} parent=11 // pred_check
        %p225 = pneg %p95
      $region18: #{tpu_custom_call.1} parent=11 // pred_check_branch
        %227 = sbr.rel (%p225) target = $region20
      $region19: #{tpu_custom_call.1} parent=11 // pred_region
        _
      $region20: #{tpu_custom_call.1} parent=11 // pred_fallthru
        _
      // Predicated region
      $region21: #{tpu_custom_call.1} parent=11 // pred_check
        %p228 = pneg %p116
      $region22: #{tpu_custom_call.1} parent=11 // pred_check_branch
        %230 = sbr.rel (%p228) target = $region24
      $region23: #{tpu_custom_call.1} parent=11 // pred_region
        _
      $region24: #{tpu_custom_call.1} parent=11 // pred_fallthru
        _
      // Predicated region
      $region25: #{tpu_custom_call.1} parent=11 // pred_check
        %p231 = pneg %p137
      $region26: #{tpu_custom_call.1} parent=11 // pred_check_branch
        %233 = sbr.rel (%p231) target = $region28
      $region27: #{tpu_custom_call.1} parent=11 // pred_region
        _
      $region28: #{tpu_custom_call.1} parent=11 // pred_fallthru
        _
      // Predicated region
      $region29: #{tpu_custom_call.1} parent=11 // pred_check
        %p234 = pneg %p158
      $region30: #{tpu_custom_call.1} parent=11 // pred_check_branch
        %236 = sbr.rel (%p234) target = $region32
      $region31: #{tpu_custom_call.1} parent=11 // pred_region
        _
      $region32: #{tpu_custom_call.1} parent=11 // pred_fallthru
        _
      // Predicated region
      $region33: #{tpu_custom_call.1} parent=11 // pred_check
        %p237 = pneg %p179
      $region34: #{tpu_custom_call.1} parent=11 // pred_check_branch
        %239 = sbr.rel (%p237) target = $region36
      $region35: #{tpu_custom_call.1} parent=11 // pred_region
        _
      $region36: #{tpu_custom_call.1} parent=11 // pred_fallthru
        _
    $region12: #{tpu_custom_call.1} parent=5 // pred_fallthru
      _
    %p240 = scmp.lt.s32.totalorder %s13, 4
    // Predicated region
    $region37: #{tpu_custom_call.1} parent=5 // pred_check
      %p241 = pneg %p240
    $region38: #{tpu_custom_call.1} parent=5 // pred_check_branch
      %243 = sbr.rel (%p241) target = $region40
    $region39: #{tpu_custom_call.1} parent=5 // pred_region
      // Predicated region
      $region41: #{tpu_custom_call.1} parent=39 // pred_check
        %p244 = pneg %p47
      $region42: #{tpu_custom_call.1} parent=39 // pred_check_branch
        %246 = sbr.rel (%p244) target = $region44
      $region43: #{tpu_custom_call.1} parent=39 // pred_region
        %p247 = scmp.lt.s32.totalorder %s20, 1
        %s248 = scalar_select %p247, %s20, 1
        %p249 = scmp.lt.s32.totalorder %s21, 1
        %s250 = scalar_select %p249, %s21, 1
        %s251 = smul.addr %s248, 2
        %s252 = sadd.s32 %s250, %s251
        %s253 = smul.addr %s252, 2
        %s254 = scalar_lea.vmem %s0, %s253
      $region44: #{tpu_custom_call.1} parent=39 // pred_fallthru
        _
    $region40: #{tpu_custom_call.1} parent=5 // pred_fallthru
      _
    %p255 = scmp.le.s32.totalorder 1, %s13
    %p256 = scmp.lt.s32.totalorder %s13, 5
    %p257 = pnand %p255, %p256
    %p258 = pneg %p257
    // Predicated region
    $region45: #{tpu_custom_call.1} parent=5 // pred_check
      _
    $region46: #{tpu_custom_call.1} parent=5 // pred_check_branch
      %260 = sbr.rel (%p257) target = $region48
    $region47: #{tpu_custom_call.1} parent=5 // pred_region
      %s261 = ssub.s32 %s13, 1
      %p262 = scmp.lt.s32.totalorder %s22, 1
      %s263 = scalar_select %p262, %s22, 1
      %p264 = scmp.lt.s32.totalorder %s23, 1
      %s265 = scalar_select %p264, %s23, 1
      %s266 = smul.addr %s263, 2
      %s267 = sadd.s32 %s265, %s266
      %s268 = smul.addr %s267, 2
      %s269 = scalar_lea.vmem %s0, %s268
      %p270 = pneg %p53
      %p271 = pneg %p50
      %p272 = pneg %p74
      %p273 = pneg %p71
      %p274 = pneg %p95
      %p275 = pneg %p92
      %p276 = pneg %p116
      %p277 = pneg %p113
      %p278 = pneg %p137
      %p279 = pneg %p134
      %p280 = pneg %p158
      %p281 = pneg %p155
      %p282 = pneg %p179
      %p283 = pneg %p176
      %p284 = pneg %p207
      %p285 = pneg %p204
      %p286 = scmp.lt.s32.totalorder %s22, 1
      %s287 = scalar_select %p286, %s22, 1
      %p288 = scmp.lt.s32.totalorder %s23, 1
      %s289 = scalar_select %p288, %s23, 1
      %s290 = smul.addr %s287, 2
      %s291 = sadd.s32 %s289, %s290
      %s292 = smul.addr %s291, 4
      %s293 = scalar_lea.vmem %s7, %s292
      %p294 = scmp.lt.s32.totalorder %s22, 1
      %s295 = scalar_select %p294, %s22, 1
      %p296 = scmp.lt.s32.totalorder %s23, 1
      %s297 = scalar_select %p296, %s23, 1
      %s298 = smul.addr %s295, 2
      %s299 = sadd.s32 %s297, %s298
      %s300 = smul.addr %s299, 2
      %s301 = scalar_lea.vmem %s0, %s300
      %p302 = scmp.lt.s32.totalorder %s22, 1
      %s303 = scalar_select %p302, %s22, 1
      %p304 = scmp.lt.s32.totalorder %s23, 1
      %s305 = scalar_select %p304, %s23, 1
      %s306 = smul.addr %s303, 2
      %s307 = sadd.s32 %s305, %s306
      %s308 = smul.addr %s307, 4
      %s309 = scalar_lea.vmem %s7, %s308
      %v310 = vld [vmem:[%s301] sm:$0x3]
      %v311 = vld [vmem:[%s1] sm:$0xff]
      %v312 = vld [vmem:[%s1 + $0x8] sm:$0xff]
      %v313 = vld [vmem:[%s1 + $0x10] sm:$0xff]
      %v314 = vld [vmem:[%s1 + $0x18] sm:$0xff]
      %v315 = vld [vmem:[%s1 + $0x20] sm:$0xff]
      %v316 = vld [vmem:[%s1 + $0x28] sm:$0xff]
      %v317 = vld [vmem:[%s1 + $0x30] sm:$0xff]
      %v318 = vld [vmem:[%s1 + $0x38] sm:$0xff]
      %v319 = vld [vmem:[%s1 + $0x40] sm:$0xff]
      %v320 = vld [vmem:[%s1 + $0x48] sm:$0xff]
      %v321 = vld [vmem:[%s1 + $0x50] sm:$0xff]
      %v322 = vld [vmem:[%s1 + $0x58] sm:$0xff]
      %v323 = vld [vmem:[%s1 + $0x60] sm:$0xff]
      %v324 = vld [vmem:[%s1 + $0x68] sm:$0xff]
      %v325 = vld [vmem:[%s1 + $0x70] sm:$0xff]
      %v326 = vld [vmem:[%s1 + $0x78] sm:$0xff]
      %v327 = vld [vmem:[%s2] sm:$0xff]
      %v328 = vld [vmem:[%s2 + $0x8] sm:$0xff]
      %v329 = vld [vmem:[%s2 + $0x10] sm:$0xff]
      %v330 = vld [vmem:[%s2 + $0x18] sm:$0xff]
      %v331 = vld [vmem:[%s2 + $0x20] sm:$0xff]
      %v332 = vld [vmem:[%s2 + $0x28] sm:$0xff]
      %v333 = vld [vmem:[%s2 + $0x30] sm:$0xff]
      %v334 = vld [vmem:[%s2 + $0x38] sm:$0xff]
      %v335 = vld [vmem:[%s2 + $0x40] sm:$0xff]
      %v336 = vld [vmem:[%s2 + $0x48] sm:$0xff]
      %v337 = vld [vmem:[%s2 + $0x50] sm:$0xff]
      %v338 = vld [vmem:[%s2 + $0x58] sm:$0xff]
      %v339 = vld [vmem:[%s2 + $0x60] sm:$0xff]
      %v340 = vld [vmem:[%s2 + $0x68] sm:$0xff]
      %v341 = vld [vmem:[%s2 + $0x70] sm:$0xff]
      %v342 = vld [vmem:[%s2 + $0x78] sm:$0xff]
      %344 = vset.pattern.permute.xlu0 0
      %345 = vperm.xlu0 %344, %v311
      %v346 = vpop.permute.xlu0 %345
      %349 = vset.pattern.permute.xlu0 0
      %350 = vperm.xlu0 %349, %v312
      %v351 = vpop.permute.xlu0 %350
      %354 = vset.pattern.permute.xlu0 0
      %355 = vperm.xlu0 %354, %v313
      %v356 = vpop.permute.xlu0 %355
      %359 = vset.pattern.permute.xlu0 0
      %360 = vperm.xlu0 %359, %v314
      %v361 = vpop.permute.xlu0 %360
      %364 = vset.pattern.permute.xlu0 0
      %365 = vperm.xlu0 %364, %v315
      %v366 = vpop.permute.xlu0 %365
      %369 = vset.pattern.permute.xlu0 0
      %370 = vperm.xlu0 %369, %v316
      %v371 = vpop.permute.xlu0 %370
      %374 = vset.pattern.permute.xlu0 0
      %375 = vperm.xlu0 %374, %v317
      %v376 = vpop.permute.xlu0 %375
      %379 = vset.pattern.permute.xlu0 0
      %380 = vperm.xlu0 %379, %v318
      %v381 = vpop.permute.xlu0 %380
      %384 = vset.pattern.permute.xlu0 0
      %385 = vperm.xlu0 %384, %v319
      %v386 = vpop.permute.xlu0 %385
      %389 = vset.pattern.permute.xlu0 0
      %390 = vperm.xlu0 %389, %v320
      %v391 = vpop.permute.xlu0 %390
      %394 = vset.pattern.permute.xlu0 0
      %395 = vperm.xlu0 %394, %v321
      %v396 = vpop.permute.xlu0 %395
      %399 = vset.pattern.permute.xlu0 0
      %400 = vperm.xlu0 %399, %v322
      %v401 = vpop.permute.xlu0 %400
      %404 = vset.pattern.permute.xlu0 0
      %405 = vperm.xlu0 %404, %v323
      %v406 = vpop.permute.xlu0 %405
      %409 = vset.pattern.permute.xlu0 0
      %410 = vperm.xlu0 %409, %v324
      %v411 = vpop.permute.xlu0 %410
      %414 = vset.pattern.permute.xlu0 0
      %415 = vperm.xlu0 %414, %v325
      %v416 = vpop.permute.xlu0 %415
      %419 = vset.pattern.permute.xlu0 0
      %420 = vperm.xlu0 %419, %v326
      %v421 = vpop.permute.xlu0 %420
      %v423 = vlaneseq
      %v424 = vshrl.u32 %v423, 7
      %v425 = vsub.s32 0, %v424
      %v426 = vrot.slane %v310, %v425
      %v427 = vmul.f32 %v346, %v426
      %v428 = vmul.f32 %v351, %v426
      %v429 = vmul.f32 %v356, %v426
      %v430 = vmul.f32 %v361, %v426
      %v431 = vmul.f32 %v366, %v426
      %v432 = vmul.f32 %v371, %v426
      %v433 = vmul.f32 %v376, %v426
      %v434 = vmul.f32 %v381, %v426
      %v435 = vmul.f32 %v386, %v426
      %v436 = vmul.f32 %v391, %v426
      %v437 = vmul.f32 %v396, %v426
      %v438 = vmul.f32 %v401, %v426
      %v439 = vmul.f32 %v406, %v426
      %v440 = vmul.f32 %v411, %v426
      %v441 = vmul.f32 %v416, %v426
      %v442 = vmul.f32 %v421, %v426
      %444 = vset.pattern.permute.xlu0 0
      %445 = vperm.xlu0 %444, %v327
      %v446 = vpop.permute.xlu0 %445
      %449 = vset.pattern.permute.xlu0 0
      %450 = vperm.xlu0 %449, %v328
      %v451 = vpop.permute.xlu0 %450
      %454 = vset.pattern.permute.xlu0 0
      %455 = vperm.xlu0 %454, %v329
      %v456 = vpop.permute.xlu0 %455
      %459 = vset.pattern.permute.xlu0 0
      %460 = vperm.xlu0 %459, %v330
      %v461 = vpop.permute.xlu0 %460
      %464 = vset.pattern.permute.xlu0 0
      %465 = vperm.xlu0 %464, %v331
      %v466 = vpop.permute.xlu0 %465
      %469 = vset.pattern.permute.xlu0 0
      %470 = vperm.xlu0 %469, %v332
      %v471 = vpop.permute.xlu0 %470
      %474 = vset.pattern.permute.xlu0 0
      %475 = vperm.xlu0 %474, %v333
      %v476 = vpop.permute.xlu0 %475
      %479 = vset.pattern.permute.xlu0 0
      %480 = vperm.xlu0 %479, %v334
      %v481 = vpop.permute.xlu0 %480
      %484 = vset.pattern.permute.xlu0 0
      %485 = vperm.xlu0 %484, %v335
      %v486 = vpop.permute.xlu0 %485
      %489 = vset.pattern.permute.xlu0 0
      %490 = vperm.xlu0 %489, %v336
      %v491 = vpop.permute.xlu0 %490
      %494 = vset.pattern.permute.xlu0 0
      %495 = vperm.xlu0 %494, %v337
      %v496 = vpop.permute.xlu0 %495
      %499 = vset.pattern.permute.xlu0 0
      %500 = vperm.xlu0 %499, %v338
      %v501 = vpop.permute.xlu0 %500
      %504 = vset.pattern.permute.xlu0 0
      %505 = vperm.xlu0 %504, %v339
      %v506 = vpop.permute.xlu0 %505
      %509 = vset.pattern.permute.xlu0 0
      %510 = vperm.xlu0 %509, %v340
      %v511 = vpop.permute.xlu0 %510
      %514 = vset.pattern.permute.xlu0 0
      %515 = vperm.xlu0 %514, %v341
      %v516 = vpop.permute.xlu0 %515
      %519 = vset.pattern.permute.xlu0 0
      %520 = vperm.xlu0 %519, %v342
      %v521 = vpop.permute.xlu0 %520
      %v523 = vadd.f32 %v446, %v427
      %v524 = vadd.f32 %v451, %v428
      %v525 = vadd.f32 %v456, %v429
      %v526 = vadd.f32 %v461, %v430
      %v527 = vadd.f32 %v466, %v431
      %v528 = vadd.f32 %v471, %v432
      %v529 = vadd.f32 %v476, %v433
      %v530 = vadd.f32 %v481, %v434
      %v531 = vadd.f32 %v486, %v435
      %v532 = vadd.f32 %v491, %v436
      %v533 = vadd.f32 %v496, %v437
      %v534 = vadd.f32 %v501, %v438
      %v535 = vadd.f32 %v506, %v439
      %v536 = vadd.f32 %v511, %v440
      %v537 = vadd.f32 %v516, %v441
      %v538 = vadd.f32 %v521, %v442
      %539 = vset.pattern.permute.xlu0 1
      %540 = vperm.xlu0 %539, %v311
      %v541 = vpop.permute.xlu0 %540
      %543 = vset.pattern.permute.xlu0 1
      %544 = vperm.xlu0 %543, %v312
      %v545 = vpop.permute.xlu0 %544
      %547 = vset.pattern.permute.xlu0 1
      %548 = vperm.xlu0 %547, %v313
      %v549 = vpop.permute.xlu0 %548
      %551 = vset.pattern.permute.xlu0 1
      %552 = vperm.xlu0 %551, %v314
      %v553 = vpop.permute.xlu0 %552
      %555 = vset.pattern.permute.xlu0 1
      %556 = vperm.xlu0 %555, %v315
      %v557 = vpop.permute.xlu0 %556
      %559 = vset.pattern.permute.xlu0 1
      %560 = vperm.xlu0 %559, %v316
      %v561 = vpop.permute.xlu0 %560
      %563 = vset.pattern.permute.xlu0 1
      %564 = vperm.xlu0 %563, %v317
      %v565 = vpop.permute.xlu0 %564
      %567 = vset.pattern.permute.xlu0 1
      %568 = vperm.xlu0 %567, %v318
      %v569 = vpop.permute.xlu0 %568
      %571 = vset.pattern.permute.xlu0 1
      %572 = vperm.xlu0 %571, %v319
      %v573 = vpop.permute.xlu0 %572
      %575 = vset.pattern.permute.xlu0 1
      %576 = vperm.xlu0 %575, %v320
      %v577 = vpop.permute.xlu0 %576
      %579 = vset.pattern.permute.xlu0 1
      %580 = vperm.xlu0 %579, %v321
      %v581 = vpop.permute.xlu0 %580
      %583 = vset.pattern.permute.xlu0 1
      %584 = vperm.xlu0 %583, %v322
      %v585 = vpop.permute.xlu0 %584
      %587 = vset.pattern.permute.xlu0 1
      %588 = vperm.xlu0 %587, %v323
      %v589 = vpop.permute.xlu0 %588
      %591 = vset.pattern.permute.xlu0 1
      %592 = vperm.xlu0 %591, %v324
      %v593 = vpop.permute.xlu0 %592
      %595 = vset.pattern.permute.xlu0 1
      %596 = vperm.xlu0 %595, %v325
      %v597 = vpop.permute.xlu0 %596
      %599 = vset.pattern.permute.xlu0 1
      %600 = vperm.xlu0 %599, %v326
      %v601 = vpop.permute.xlu0 %600
      %v603 = vlaneseq
      %v604 = vshrl.u32 %v603, 7
      %v605 = vsub.s32 1, %v604
      %v606 = vrot.slane %v310, %v605
      %v607 = vmul.f32 %v541, %v606
      %v608 = vmul.f32 %v545, %v606
      %v609 = vmul.f32 %v549, %v606
      %v610 = vmul.f32 %v553, %v606
      %v611 = vmul.f32 %v557, %v606
      %v612 = vmul.f32 %v561, %v606
      %v613 = vmul.f32 %v565, %v606
      %v614 = vmul.f32 %v569, %v606
      %v615 = vmul.f32 %v573, %v606
      %v616 = vmul.f32 %v577, %v606
      %v617 = vmul.f32 %v581, %v606
      %v618 = vmul.f32 %v585, %v606
      %v619 = vmul.f32 %v589, %v606
      %v620 = vmul.f32 %v593, %v606
      %v621 = vmul.f32 %v597, %v606
      %v622 = vmul.f32 %v601, %v606
      %v623 = vadd.f32 %v523, %v607
      %v624 = vadd.f32 %v524, %v608
      %v625 = vadd.f32 %v525, %v609
      %v626 = vadd.f32 %v526, %v610
      %v627 = vadd.f32 %v527, %v611
      %v628 = vadd.f32 %v528, %v612
      %v629 = vadd.f32 %v529, %v613
      %v630 = vadd.f32 %v530, %v614
      %v631 = vadd.f32 %v531, %v615
      %v632 = vadd.f32 %v532, %v616
      %v633 = vadd.f32 %v533, %v617
      %v634 = vadd.f32 %v534, %v618
      %v635 = vadd.f32 %v535, %v619
      %v636 = vadd.f32 %v536, %v620
      %v637 = vadd.f32 %v537, %v621
      %v638 = vadd.f32 %v538, %v622
      %v639 = vmax.f32 %v623, 0.0
      %v640 = vmax.f32 %v624, 0.0
      %v641 = vmax.f32 %v625, 0.0
      %v642 = vmax.f32 %v626, 0.0
      %v643 = vmax.f32 %v627, 0.0
      %v644 = vmax.f32 %v628, 0.0
      %v645 = vmax.f32 %v629, 0.0
      %v646 = vmax.f32 %v630, 0.0
      %v647 = vmax.f32 %v631, 0.0
      %v648 = vmax.f32 %v632, 0.0
      %v649 = vmax.f32 %v633, 0.0
      %v650 = vmax.f32 %v634, 0.0
      %v651 = vmax.f32 %v635, 0.0
      %v652 = vmax.f32 %v636, 0.0
      %v653 = vmax.f32 %v637, 0.0
      %v654 = vmax.f32 %v638, 0.0
      %v655 = vld [vmem:[%s3] sm:$0xff]
      %v656 = vld [vmem:[%s3 + $0x8] sm:$0xff]
      %v657 = vld [vmem:[%s3 + $0x10] sm:$0xff]
      %v658 = vld [vmem:[%s3 + $0x18] sm:$0xff]
      %v659 = vld [vmem:[%s3 + $0x20] sm:$0xff]
      %v660 = vld [vmem:[%s3 + $0x28] sm:$0xff]
      %v661 = vld [vmem:[%s3 + $0x30] sm:$0xff]
      %v662 = vld [vmem:[%s3 + $0x38] sm:$0xff]
      %v663 = vld [vmem:[%s3 + $0x40] sm:$0xff]
      %v664 = vld [vmem:[%s3 + $0x48] sm:$0xff]
      %v665 = vld [vmem:[%s3 + $0x50] sm:$0xff]
      %v666 = vld [vmem:[%s3 + $0x58] sm:$0xff]
      %v667 = vld [vmem:[%s3 + $0x60] sm:$0xff]
      %v668 = vld [vmem:[%s3 + $0x68] sm:$0xff]
      %v669 = vld [vmem:[%s3 + $0x70] sm:$0xff]
      %v670 = vld [vmem:[%s3 + $0x78] sm:$0xff]
      %v671 = vld [vmem:[%s4] sm:$0xff]
      %v672 = vld [vmem:[%s4 + $0x8] sm:$0xff]
      %v673 = vld [vmem:[%s4 + $0x10] sm:$0xff]
      %v674 = vld [vmem:[%s4 + $0x18] sm:$0xff]
      %v675 = vld [vmem:[%s4 + $0x20] sm:$0xff]
      %v676 = vld [vmem:[%s4 + $0x28] sm:$0xff]
      %v677 = vld [vmem:[%s4 + $0x30] sm:$0xff]
      %v678 = vld [vmem:[%s4 + $0x38] sm:$0xff]
      %v679 = vld [vmem:[%s4 + $0x40] sm:$0xff]
      %v680 = vld [vmem:[%s4 + $0x48] sm:$0xff]
      %v681 = vld [vmem:[%s4 + $0x50] sm:$0xff]
      %v682 = vld [vmem:[%s4 + $0x58] sm:$0xff]
      %v683 = vld [vmem:[%s4 + $0x60] sm:$0xff]
      %v684 = vld [vmem:[%s4 + $0x68] sm:$0xff]
      %v685 = vld [vmem:[%s4 + $0x70] sm:$0xff]
      %v686 = vld [vmem:[%s4 + $0x78] sm:$0xff]
      %688 = vset.pattern.permute.xlu0 0
      %689 = vperm.xlu0 %688, %v671
      %v690 = vpop.permute.xlu0 %689
      %693 = vset.pattern.permute.xlu0 0
      %694 = vperm.xlu0 %693, %v672
      %v695 = vpop.permute.xlu0 %694
      %698 = vset.pattern.permute.xlu0 0
      %699 = vperm.xlu0 %698, %v673
      %v700 = vpop.permute.xlu0 %699
      %703 = vset.pattern.permute.xlu0 0
      %704 = vperm.xlu0 %703, %v674
      %v705 = vpop.permute.xlu0 %704
      %708 = vset.pattern.permute.xlu0 0
      %709 = vperm.xlu0 %708, %v675
      %v710 = vpop.permute.xlu0 %709
      %713 = vset.pattern.permute.xlu0 0
      %714 = vperm.xlu0 %713, %v676
      %v715 = vpop.permute.xlu0 %714
      %718 = vset.pattern.permute.xlu0 0
      %719 = vperm.xlu0 %718, %v677
      %v720 = vpop.permute.xlu0 %719
      %723 = vset.pattern.permute.xlu0 0
      %724 = vperm.xlu0 %723, %v678
      %v725 = vpop.permute.xlu0 %724
      %728 = vset.pattern.permute.xlu0 0
      %729 = vperm.xlu0 %728, %v679
      %v730 = vpop.permute.xlu0 %729
      %733 = vset.pattern.permute.xlu0 0
      %734 = vperm.xlu0 %733, %v680
      %v735 = vpop.permute.xlu0 %734
      %738 = vset.pattern.permute.xlu0 0
      %739 = vperm.xlu0 %738, %v681
      %v740 = vpop.permute.xlu0 %739
      %743 = vset.pattern.permute.xlu0 0
      %744 = vperm.xlu0 %743, %v682
      %v745 = vpop.permute.xlu0 %744
      %748 = vset.pattern.permute.xlu0 0
      %749 = vperm.xlu0 %748, %v683
      %v750 = vpop.permute.xlu0 %749
      %753 = vset.pattern.permute.xlu0 0
      %754 = vperm.xlu0 %753, %v684
      %v755 = vpop.permute.xlu0 %754
      %758 = vset.pattern.permute.xlu0 0
      %759 = vperm.xlu0 %758, %v685
      %v760 = vpop.permute.xlu0 %759
      %763 = vset.pattern.permute.xlu0 0
      %764 = vperm.xlu0 %763, %v686
      %v765 = vpop.permute.xlu0 %764
      %767 = vmatprep.subr.mxu0 0.0
      %768 = vmatpush1.msra.mxu0 %v654
      %769 = vmatprep.subr.mxu0 0.0
      %770 = vmatpush1.msra.mxu0 %v653
      %771 = vmatprep.subr.mxu0 0.0
      %772 = vmatpush1.msra.mxu0 %v652
      %773 = vmatprep.subr.mxu0 0.0
      %774 = vmatpush1.msra.mxu0 %v651
      %775 = vmatprep.subr.mxu0 0.0
      %776 = vmatpush1.msra.mxu0 %v650
      %777 = vmatprep.subr.mxu0 0.0
      %778 = vmatpush1.msra.mxu0 %v649
      %779 = vmatprep.subr.mxu0 0.0
      %780 = vmatpush1.msra.mxu0 %v648
      %781 = vmatprep.subr.mxu0 0.0
      %782 = vmatpush1.msra.mxu0 %v647
      %783 = vmatprep.subr.mxu0 0.0
      %784 = vmatpush1.msra.mxu0 %v646
      %785 = vmatprep.subr.mxu0 0.0
      %786 = vmatpush1.msra.mxu0 %v645
      %787 = vmatprep.subr.mxu0 0.0
      %788 = vmatpush1.msra.mxu0 %v644
      %789 = vmatprep.subr.mxu0 0.0
      %790 = vmatpush1.msra.mxu0 %v643
      %791 = vmatprep.subr.mxu0 0.0
      %792 = vmatpush1.msra.mxu0 %v642
      %793 = vmatprep.subr.mxu0 0.0
      %794 = vmatpush1.msra.mxu0 %v641
      %795 = vmatprep.subr.mxu0 0.0
      %796 = vmatpush1.msra.mxu0 %v640
      %797 = vmatprep.subr.mxu0 0.0
      %798 = vmatpush1.msra.mxu0 %v639
      %799 = vmatprep.subr.mxu0 0.0
      %800 = vmatpush2.msra.mxu0 0.0
      %801 = vmatprep.subr.mxu0 0.0
      %802 = vmatpush2.msra.mxu0 0.0
      %803 = vmatprep.subr.mxu0 0.0
      %804 = vmatpush2.msra.mxu0 0.0
      %805 = vmatprep.subr.mxu0 0.0
      %806 = vmatpush2.msra.mxu0 0.0
      %807 = vmatprep.subr.mxu0 0.0
      %808 = vmatpush2.msra.mxu0 0.0
      %809 = vmatprep.subr.mxu0 0.0
      %810 = vmatpush2.msra.mxu0 0.0
      %811 = vmatprep.subr.mxu0 0.0
      %812 = vmatpush2.msra.mxu0 0.0
      %813 = vmatprep.subr.mxu0 0.0
      %814 = vmatpush2.msra.mxu0 0.0
      %815 = vmatprep.subr.mxu0 0.0
      %816 = vmatpush2.msra.mxu0 0.0
      %817 = vmatprep.subr.mxu0 0.0
      %818 = vmatpush2.msra.mxu0 0.0
      %819 = vmatprep.subr.mxu0 0.0
      %820 = vmatpush2.msra.mxu0 0.0
      %821 = vmatprep.subr.mxu0 0.0
      %822 = vmatpush2.msra.mxu0 0.0
      %823 = vmatprep.subr.mxu0 0.0
      %824 = vmatpush2.msra.mxu0 0.0
      %825 = vmatprep.subr.mxu0 0.0
      %826 = vmatpush2.msra.mxu0 0.0
      %827 = vmatprep.subr.mxu0 0.0
      %828 = vmatpush2.msra.mxu0 0.0
      %829 = vmatprep.subr.mxu0 0.0
      %830 = vmatpush2.msra.mxu0 0.0
      %831 = vmatprep.mubr.f32.mxu0 0.0
      %832 = vmatmul.mubr.f32.gmra.mxu0 %v655
      %v833 = vpop.f32.mrf.mxu0
      %v834 = vadd.f32 %v690, %v833
      %v835 = vpop.f32.mrf.mxu0
      %836 = vmatprep.mubr.f32.mxu0 0.0
      %837 = vmatmul.mubr.f32.gmra.mxu0 %v656
      %v838 = vpop.f32.mrf.mxu0
      %v839 = vadd.f32 %v695, %v838
      %v840 = vpop.f32.mrf.mxu0
      %841 = vmatprep.mubr.f32.mxu0 0.0
      %842 = vmatmul.mubr.f32.gmra.mxu0 %v657
      %v843 = vpop.f32.mrf.mxu0
      %v844 = vadd.f32 %v700, %v843
      %v845 = vpop.f32.mrf.mxu0
      %846 = vmatprep.mubr.f32.mxu0 0.0
      %847 = vmatmul.mubr.f32.gmra.mxu0 %v658
      %v848 = vpop.f32.mrf.mxu0
      %v849 = vadd.f32 %v705, %v848
      %v850 = vpop.f32.mrf.mxu0
      %851 = vmatprep.mubr.f32.mxu0 0.0
      %852 = vmatmul.mubr.f32.gmra.mxu0 %v659
      %v853 = vpop.f32.mrf.mxu0
      %v854 = vadd.f32 %v710, %v853
      %v855 = vpop.f32.mrf.mxu0
      %856 = vmatprep.mubr.f32.mxu0 0.0
      %857 = vmatmul.mubr.f32.gmra.mxu0 %v660
      %v858 = vpop.f32.mrf.mxu0
      %v859 = vadd.f32 %v715, %v858
      %v860 = vpop.f32.mrf.mxu0
      %861 = vmatprep.mubr.f32.mxu0 0.0
      %862 = vmatmul.mubr.f32.gmra.mxu0 %v661
      %v863 = vpop.f32.mrf.mxu0
      %v864 = vadd.f32 %v720, %v863
      %v865 = vpop.f32.mrf.mxu0
      %866 = vmatprep.mubr.f32.mxu0 0.0
      %867 = vmatmul.mubr.f32.gmra.mxu0 %v662
      %v868 = vpop.f32.mrf.mxu0
      %v869 = vadd.f32 %v725, %v868
      %v870 = vpop.f32.mrf.mxu0
      %871 = vmatprep.mubr.f32.mxu0 0.0
      %872 = vmatmul.mubr.f32.gmra.mxu0 %v663
      %v873 = vpop.f32.mrf.mxu0
      %v874 = vadd.f32 %v730, %v873
      %v875 = vpop.f32.mrf.mxu0
      %876 = vmatprep.mubr.f32.mxu0 0.0
      %877 = vmatmul.mubr.f32.gmra.mxu0 %v664
      %v878 = vpop.f32.mrf.mxu0
      %v879 = vadd.f32 %v735, %v878
      %v880 = vpop.f32.mrf.mxu0
      %881 = vmatprep.mubr.f32.mxu0 0.0
      %882 = vmatmul.mubr.f32.gmra.mxu0 %v665
      %v883 = vpop.f32.mrf.mxu0
      %v884 = vadd.f32 %v740, %v883
      %v885 = vpop.f32.mrf.mxu0
      %886 = vmatprep.mubr.f32.mxu0 0.0
      %887 = vmatmul.mubr.f32.gmra.mxu0 %v666
      %v888 = vpop.f32.mrf.mxu0
      %v889 = vadd.f32 %v745, %v888
      %v890 = vpop.f32.mrf.mxu0
      %891 = vmatprep.mubr.f32.mxu0 0.0
      %892 = vmatmul.mubr.f32.gmra.mxu0 %v667
      %v893 = vpop.f32.mrf.mxu0
      %v894 = vadd.f32 %v750, %v893
      %v895 = vpop.f32.mrf.mxu0
      %896 = vmatprep.mubr.f32.mxu0 0.0
      %897 = vmatmul.mubr.f32.gmra.mxu0 %v668
      %v898 = vpop.f32.mrf.mxu0
      %v899 = vadd.f32 %v755, %v898
      %v900 = vpop.f32.mrf.mxu0
      %901 = vmatprep.mubr.f32.mxu0 0.0
      %902 = vmatmul.mubr.f32.gmra.mxu0 %v669
      %v903 = vpop.f32.mrf.mxu0
      %v904 = vadd.f32 %v760, %v903
      %v905 = vpop.f32.mrf.mxu0
      %906 = vmatprep.mubr.f32.mxu0 0.0
      %907 = vmatmul.mubr.f32.gmra.mxu0 %v670
      %v908 = vpop.f32.mrf.mxu0
      %v909 = vadd.f32 %v765, %v908
      %v910 = vpop.f32.mrf.mxu0
      %911 = vdwg.mxu0
      %v912 = vmax.f32 %v834, 0.0
      %v913 = vmax.f32 %v839, 0.0
      %v914 = vmax.f32 %v844, 0.0
      %v915 = vmax.f32 %v849, 0.0
      %v916 = vmax.f32 %v854, 0.0
      %v917 = vmax.f32 %v859, 0.0
      %v918 = vmax.f32 %v864, 0.0
      %v919 = vmax.f32 %v869, 0.0
      %v920 = vmax.f32 %v874, 0.0
      %v921 = vmax.f32 %v879, 0.0
      %v922 = vmax.f32 %v884, 0.0
      %v923 = vmax.f32 %v889, 0.0
      %v924 = vmax.f32 %v894, 0.0
      %v925 = vmax.f32 %v899, 0.0
      %v926 = vmax.f32 %v904, 0.0
      %v927 = vmax.f32 %v909, 0.0
      %v928 = vld [vmem:[%s5] sm:$0xff]
      %v929 = vld [vmem:[%s5 + $0x8] sm:$0xff]
      %v930 = vld [vmem:[%s5 + $0x10] sm:$0xff]
      %v931 = vld [vmem:[%s5 + $0x18] sm:$0xff]
      %v932 = vld [vmem:[%s5 + $0x20] sm:$0xff]
      %v933 = vld [vmem:[%s5 + $0x28] sm:$0xff]
      %v934 = vld [vmem:[%s5 + $0x30] sm:$0xff]
      %v935 = vld [vmem:[%s5 + $0x38] sm:$0xff]
      %v936 = vld [vmem:[%s5 + $0x40] sm:$0xff]
      %v937 = vld [vmem:[%s5 + $0x48] sm:$0xff]
      %v938 = vld [vmem:[%s5 + $0x50] sm:$0xff]
      %v939 = vld [vmem:[%s5 + $0x58] sm:$0xff]
      %v940 = vld [vmem:[%s5 + $0x60] sm:$0xff]
      %v941 = vld [vmem:[%s5 + $0x68] sm:$0xff]
      %v942 = vld [vmem:[%s5 + $0x70] sm:$0xff]
      %v943 = vld [vmem:[%s5 + $0x78] sm:$0xff]
      %945 = vset.pattern.permute.xlu0 0
      %946 = vperm.xlu0 %945, %v928
      %v947 = vpop.permute.xlu0 %946
      %950 = vset.pattern.permute.xlu0 0
      %951 = vperm.xlu0 %950, %v929
      %v952 = vpop.permute.xlu0 %951
      %955 = vset.pattern.permute.xlu0 0
      %956 = vperm.xlu0 %955, %v930
      %v957 = vpop.permute.xlu0 %956
      %960 = vset.pattern.permute.xlu0 0
      %961 = vperm.xlu0 %960, %v931
      %v962 = vpop.permute.xlu0 %961
      %965 = vset.pattern.permute.xlu0 0
      %966 = vperm.xlu0 %965, %v932
      %v967 = vpop.permute.xlu0 %966
      %970 = vset.pattern.permute.xlu0 0
      %971 = vperm.xlu0 %970, %v933
      %v972 = vpop.permute.xlu0 %971
      %975 = vset.pattern.permute.xlu0 0
      %976 = vperm.xlu0 %975, %v934
      %v977 = vpop.permute.xlu0 %976
      %980 = vset.pattern.permute.xlu0 0
      %981 = vperm.xlu0 %980, %v935
      %v982 = vpop.permute.xlu0 %981
      %985 = vset.pattern.permute.xlu0 0
      %986 = vperm.xlu0 %985, %v936
      %v987 = vpop.permute.xlu0 %986
      %990 = vset.pattern.permute.xlu0 0
      %991 = vperm.xlu0 %990, %v937
      %v992 = vpop.permute.xlu0 %991
      %995 = vset.pattern.permute.xlu0 0
      %996 = vperm.xlu0 %995, %v938
      %v997 = vpop.permute.xlu0 %996
      %1000 = vset.pattern.permute.xlu0 0
      %1001 = vperm.xlu0 %1000, %v939
      %v1002 = vpop.permute.xlu0 %1001
      %1005 = vset.pattern.permute.xlu0 0
      %1006 = vperm.xlu0 %1005, %v940
      %v1007 = vpop.permute.xlu0 %1006
      %1010 = vset.pattern.permute.xlu0 0
      %1011 = vperm.xlu0 %1010, %v941
      %v1012 = vpop.permute.xlu0 %1011
      %1015 = vset.pattern.permute.xlu0 0
      %1016 = vperm.xlu0 %1015, %v942
      %v1017 = vpop.permute.xlu0 %1016
      %1020 = vset.pattern.permute.xlu0 0
      %1021 = vperm.xlu0 %1020, %v943
      %v1022 = vpop.permute.xlu0 %1021
      %v1024 = vmul.f32 %v947, %v912
      %v1025 = vmul.f32 %v952, %v913
      %v1026 = vmul.f32 %v957, %v914
      %v1027 = vmul.f32 %v962, %v915
      %v1028 = vmul.f32 %v967, %v916
      %v1029 = vmul.f32 %v972, %v917
      %v1030 = vmul.f32 %v977, %v918
      %v1031 = vmul.f32 %v982, %v919
      %v1032 = vmul.f32 %v987, %v920
      %v1033 = vmul.f32 %v992, %v921
      %v1034 = vmul.f32 %v997, %v922
      %v1035 = vmul.f32 %v1002, %v923
      %v1036 = vmul.f32 %v1007, %v924
      %v1037 = vmul.f32 %v1012, %v925
      %v1038 = vmul.f32 %v1017, %v926
      %v1039 = vmul.f32 %v1022, %v927
      %v1040 = vadd.f32 %v1024, %v1025
      %v1041 = vadd.f32 %v1040, %v1026
      %v1042 = vadd.f32 %v1041, %v1027
      %v1043 = vadd.f32 %v1042, %v1028
      %v1044 = vadd.f32 %v1043, %v1029
      %v1045 = vadd.f32 %v1044, %v1030
      %v1046 = vadd.f32 %v1045, %v1031
      %v1047 = vadd.f32 %v1046, %v1032
      %v1048 = vadd.f32 %v1047, %v1033
      %v1049 = vadd.f32 %v1048, %v1034
      %v1050 = vadd.f32 %v1049, %v1035
      %v1051 = vadd.f32 %v1050, %v1036
      %v1052 = vadd.f32 %v1051, %v1037
      %v1053 = vadd.f32 %v1052, %v1038
      %v1054 = vadd.f32 %v1053, %v1039
      %v1055 = vrot.slane %v1054, 4
      %v1056 = vadd.f32 %v1054, %v1055
      %v1057 = vrot.slane %v1056, 2
      %v1058 = vadd.f32 %v1056, %v1057
      %v1059 = vrot.slane %v1058, 1
      %v1060 = vadd.f32 %v1058, %v1059
      %1061 = vset.pattern.permute.xlu0 1
      %1062 = vperm.xlu0 %1061, %v928
      %v1063 = vpop.permute.xlu0 %1062
      %1065 = vset.pattern.permute.xlu0 1
      %1066 = vperm.xlu0 %1065, %v929
      %v1067 = vpop.permute.xlu0 %1066
      %1069 = vset.pattern.permute.xlu0 1
      %1070 = vperm.xlu0 %1069, %v930
      %v1071 = vpop.permute.xlu0 %1070
      %1073 = vset.pattern.permute.xlu0 1
      %1074 = vperm.xlu0 %1073, %v931
      %v1075 = vpop.permute.xlu0 %1074
      %1077 = vset.pattern.permute.xlu0 1
      %1078 = vperm.xlu0 %1077, %v932
      %v1079 = vpop.permute.xlu0 %1078
      %1081 = vset.pattern.permute.xlu0 1
      %1082 = vperm.xlu0 %1081, %v933
      %v1083 = vpop.permute.xlu0 %1082
      %1085 = vset.pattern.permute.xlu0 1
      %1086 = vperm.xlu0 %1085, %v934
      %v1087 = vpop.permute.xlu0 %1086
      %1089 = vset.pattern.permute.xlu0 1
      %1090 = vperm.xlu0 %1089, %v935
      %v1091 = vpop.permute.xlu0 %1090
      %1093 = vset.pattern.permute.xlu0 1
      %1094 = vperm.xlu0 %1093, %v936
      %v1095 = vpop.permute.xlu0 %1094
      %1097 = vset.pattern.permute.xlu0 1
      %1098 = vperm.xlu0 %1097, %v937
      %v1099 = vpop.permute.xlu0 %1098
      %1101 = vset.pattern.permute.xlu0 1
      %1102 = vperm.xlu0 %1101, %v938
      %v1103 = vpop.permute.xlu0 %1102
      %1105 = vset.pattern.permute.xlu0 1
      %1106 = vperm.xlu0 %1105, %v939
      %v1107 = vpop.permute.xlu0 %1106
      %1109 = vset.pattern.permute.xlu0 1
      %1110 = vperm.xlu0 %1109, %v940
      %v1111 = vpop.permute.xlu0 %1110
      %1113 = vset.pattern.permute.xlu0 1
      %1114 = vperm.xlu0 %1113, %v941
      %v1115 = vpop.permute.xlu0 %1114
      %1117 = vset.pattern.permute.xlu0 1
      %1118 = vperm.xlu0 %1117, %v942
      %v1119 = vpop.permute.xlu0 %1118
      %1121 = vset.pattern.permute.xlu0 1
      %1122 = vperm.xlu0 %1121, %v943
      %v1123 = vpop.permute.xlu0 %1122
      %v1125 = vmul.f32 %v1063, %v912
      %v1126 = vmul.f32 %v1067, %v913
      %v1127 = vmul.f32 %v1071, %v914
      %v1128 = vmul.f32 %v1075, %v915
      %v1129 = vmul.f32 %v1079, %v916
      %v1130 = vmul.f32 %v1083, %v917
      %v1131 = vmul.f32 %v1087, %v918
      %v1132 = vmul.f32 %v1091, %v919
      %v1133 = vmul.f32 %v1095, %v920
      %v1134 = vmul.f32 %v1099, %v921
      %v1135 = vmul.f32 %v1103, %v922
      %v1136 = vmul.f32 %v1107, %v923
      %v1137 = vmul.f32 %v1111, %v924
      %v1138 = vmul.f32 %v1115, %v925
      %v1139 = vmul.f32 %v1119, %v926
      %v1140 = vmul.f32 %v1123, %v927
      %v1141 = vadd.f32 %v1125, %v1126
      %v1142 = vadd.f32 %v1141, %v1127
      %v1143 = vadd.f32 %v1142, %v1128
      %v1144 = vadd.f32 %v1143, %v1129
      %v1145 = vadd.f32 %v1144, %v1130
      %v1146 = vadd.f32 %v1145, %v1131
      %v1147 = vadd.f32 %v1146, %v1132
      %v1148 = vadd.f32 %v1147, %v1133
      %v1149 = vadd.f32 %v1148, %v1134
      %v1150 = vadd.f32 %v1149, %v1135
      %v1151 = vadd.f32 %v1150, %v1136
      %v1152 = vadd.f32 %v1151, %v1137
      %v1153 = vadd.f32 %v1152, %v1138
      %v1154 = vadd.f32 %v1153, %v1139
      %v1155 = vadd.f32 %v1154, %v1140
      %v1156 = vrot.slane %v1155, 4
      %v1157 = vadd.f32 %v1155, %v1156
      %v1158 = vrot.slane %v1157, 2
      %v1159 = vadd.f32 %v1157, %v1158
      %v1160 = vrot.slane %v1159, 1
      %v1161 = vadd.f32 %v1159, %v1160
      %1162 = vset.pattern.permute.xlu0 2
      %1163 = vperm.xlu0 %1162, %v928
      %v1164 = vpop.permute.xlu0 %1163
      %1166 = vset.pattern.permute.xlu0 2
      %1167 = vperm.xlu0 %1166, %v929
      %v1168 = vpop.permute.xlu0 %1167
      %1170 = vset.pattern.permute.xlu0 2
      %1171 = vperm.xlu0 %1170, %v930
      %v1172 = vpop.permute.xlu0 %1171
      %1174 = vset.pattern.permute.xlu0 2
      %1175 = vperm.xlu0 %1174, %v931
      %v1176 = vpop.permute.xlu0 %1175
      %1178 = vset.pattern.permute.xlu0 2
      %1179 = vperm.xlu0 %1178, %v932
      %v1180 = vpop.permute.xlu0 %1179
      %1182 = vset.pattern.permute.xlu0 2
      %1183 = vperm.xlu0 %1182, %v933
      %v1184 = vpop.permute.xlu0 %1183
      %1186 = vset.pattern.permute.xlu0 2
      %1187 = vperm.xlu0 %1186, %v934
      %v1188 = vpop.permute.xlu0 %1187
      %1190 = vset.pattern.permute.xlu0 2
      %1191 = vperm.xlu0 %1190, %v935
      %v1192 = vpop.permute.xlu0 %1191
      %1194 = vset.pattern.permute.xlu0 2
      %1195 = vperm.xlu0 %1194, %v936
      %v1196 = vpop.permute.xlu0 %1195
      %1198 = vset.pattern.permute.xlu0 2
      %1199 = vperm.xlu0 %1198, %v937
      %v1200 = vpop.permute.xlu0 %1199
      %1202 = vset.pattern.permute.xlu0 2
      %1203 = vperm.xlu0 %1202, %v938
      %v1204 = vpop.permute.xlu0 %1203
      %1206 = vset.pattern.permute.xlu0 2
      %1207 = vperm.xlu0 %1206, %v939
      %v1208 = vpop.permute.xlu0 %1207
      %1210 = vset.pattern.permute.xlu0 2
      %1211 = vperm.xlu0 %1210, %v940
      %v1212 = vpop.permute.xlu0 %1211
      %1214 = vset.pattern.permute.xlu0 2
      %1215 = vperm.xlu0 %1214, %v941
      %v1216 = vpop.permute.xlu0 %1215
      %1218 = vset.pattern.permute.xlu0 2
      %1219 = vperm.xlu0 %1218, %v942
      %v1220 = vpop.permute.xlu0 %1219
      %1222 = vset.pattern.permute.xlu0 2
      %1223 = vperm.xlu0 %1222, %v943
      %v1224 = vpop.permute.xlu0 %1223
      %v1226 = vmul.f32 %v1164, %v912
      %v1227 = vmul.f32 %v1168, %v913
      %v1228 = vmul.f32 %v1172, %v914
      %v1229 = vmul.f32 %v1176, %v915
      %v1230 = vmul.f32 %v1180, %v916
      %v1231 = vmul.f32 %v1184, %v917
      %v1232 = vmul.f32 %v1188, %v918
      %v1233 = vmul.f32 %v1192, %v919
      %v1234 = vmul.f32 %v1196, %v920
      %v1235 = vmul.f32 %v1200, %v921
      %v1236 = vmul.f32 %v1204, %v922
      %v1237 = vmul.f32 %v1208, %v923
      %v1238 = vmul.f32 %v1212, %v924
      %v1239 = vmul.f32 %v1216, %v925
      %v1240 = vmul.f32 %v1220, %v926
      %v1241 = vmul.f32 %v1224, %v927
      %v1242 = vadd.f32 %v1226, %v1227
      %v1243 = vadd.f32 %v1242, %v1228
      %v1244 = vadd.f32 %v1243, %v1229
      %v1245 = vadd.f32 %v1244, %v1230
      %v1246 = vadd.f32 %v1245, %v1231
      %v1247 = vadd.f32 %v1246, %v1232
      %v1248 = vadd.f32 %v1247, %v1233
      %v1249 = vadd.f32 %v1248, %v1234
      %v1250 = vadd.f32 %v1249, %v1235
      %v1251 = vadd.f32 %v1250, %v1236
      %v1252 = vadd.f32 %v1251, %v1237
      %v1253 = vadd.f32 %v1252, %v1238
      %v1254 = vadd.f32 %v1253, %v1239
      %v1255 = vadd.f32 %v1254, %v1240
      %v1256 = vadd.f32 %v1255, %v1241
      %v1257 = vrot.slane %v1256, 4
      %v1258 = vadd.f32 %v1256, %v1257
      %v1259 = vrot.slane %v1258, 2
      %v1260 = vadd.f32 %v1258, %v1259
      %v1261 = vrot.slane %v1260, 1
      %v1262 = vadd.f32 %v1260, %v1261
      %vm1263 = vcmask 1040384
      %v1264 = vsel %vm1263, %v1060, %v1161
      %vm1265 = vcmask 1041408
      %v1266 = vsel %vm1265, %v1264, %v1262
      %v1267 = vld [vmem:[%s6] sm:$0x7]
      %1269 = vset.pattern.permute.xlu0 0
      %1270 = vperm.xlu0 %1269, %v1267
      %v1271 = vpop.permute.xlu0 %1270
      %v1273 = vadd.f32 %v1266, %v1271
      %v1274 = vtanh.pop %v1273
      %1275 = vst [vmem:[%s309] sm:$0x7] %v1274
      %p1276 = scmp.lt.s32.totalorder %s22, 1
      %s1277 = scalar_select %p1276, %s22, 1
      %p1278 = scmp.lt.s32.totalorder %s23, 1
      %s1279 = scalar_select %p1278, %s23, 1
      %s1280 = smul.addr %s1277, 2
      %s1281 = sadd.s32 %s1279, %s1280
      %s1282 = smul.addr %s1281, 4
      %s1283 = scalar_lea.vmem %s7, %s1282
      // Predicated region
      $region49: #{tpu_custom_call.1} parent=47 // pred_check
        %p1284 = pneg %p204
      $region50: #{tpu_custom_call.1} parent=47 // pred_check_branch
        %1286 = sbr.rel (%p1284) target = $region52
      $region51: #{tpu_custom_call.1} parent=47 // pred_region
        _
      $region52: #{tpu_custom_call.1} parent=47 // pred_fallthru
        _
    $region48: #{tpu_custom_call.1} parent=5 // pred_fallthru
      _
    %p1287 = scmp.le.s32.totalorder 2, %s13
    // Predicated region
    $region53: #{tpu_custom_call.1} parent=5 // pred_check
      %p1288 = pneg %p1287
    $region54: #{tpu_custom_call.1} parent=5 // pred_check_branch
      %1290 = sbr.rel (%p1288) target = $region56
    $region55: #{tpu_custom_call.1} parent=5 // pred_region
      %s1291 = ssub.s32 %s13, 2
      // Predicated region
      $region57: #{tpu_custom_call.1} parent=55 // pred_check
        %p1292 = pneg %p210
      $region58: #{tpu_custom_call.1} parent=55 // pred_check_branch
        %1294 = sbr.rel (%p1292) target = $region60
      $region59: #{tpu_custom_call.1} parent=55 // pred_region
        %p1295 = scmp.lt.s32.totalorder %s24, 1
        %s1296 = scalar_select %p1295, %s24, 1
        %p1297 = scmp.lt.s32.totalorder %s25, 1
        %s1298 = scalar_select %p1297, %s25, 1
        %s1299 = smul.addr %s1296, 2
        %s1300 = sadd.s32 %s1298, %s1299
        %s1301 = smul.addr %s1300, 4
        %s1302 = scalar_lea.vmem %s7, %s1301
      $region60: #{tpu_custom_call.1} parent=55 // pred_fallthru
        _
    $region56: #{tpu_custom_call.1} parent=5 // pred_fallthru
      _
  $region6: #{tpu_custom_call.1} parent=0 // loop_footer
    %s17 = sadd.s32 1, %s13
  $region7: #{tpu_custom_call.1} parent=0 // loop_footer_branch
    %12 = sbr.rel target = $region3
  $region8: #{tpu_custom_call.1} parent=0 // loop_exit
    _

</llo_original>
